<compile_context>
chip_gen: v7x
topology: tpu7x:2x2x1
jax: 0.10.0
libtpu: 0.0.40
codegen_flags: <defaults>
</compile_context>

<pallas_src>
import jax
import jax.numpy as jnp
from jax.experimental import pallas as pl
from jax.experimental.pallas import tpu as pltpu

BN_EPS = 1e-5


# --------------------------------------------------------------------------- kernel

def _make_kernel(epi_bf16):
    """Build the kernel body; epi_bf16 selects bf16 bias+ReLU epilogues (v6e/v7x)."""

    def kernel(x_ref,      # (Bt, Tn, 3)  f32
               w1_ref,     # (3, 64)      bf16  (BN1 scale folded into columns)
               w2_ref,     # (64, 128)    bf16  (BN2 scale folded in)
               w3_ref,     # (128, C)     bf16  (BN3 scale folded in)
               wl_ref,     # (C, C)       bf16  (BN4 scale folded in)
               b_ref,      # (8, C)       f32   bias rows [b1, b2, b3, b4, 0, 0, 0, 0]
               o_ref,      # (Bt, C)      f32
               gmax_ref):  # (Bt, C)      f32   running max scratch
        bt, tn, _ = x_ref.shape
        c = o_ref.shape[1]
        n = pl.program_id(1)
        n_last = pl.num_programs(1) - 1

        # init running max for this batch block
        @pl.when(n == 0)
        def _():
            gmax_ref[...] = jnp.full(gmax_ref.shape, -jnp.inf, gmax_ref.dtype)

        # flatten batch*points so the MXU sees a tall LHS
        x = x_ref[...].reshape(bt * tn, 3).astype(jnp.bfloat16)

        # conv1 (1x1, K=3) + BN1 + ReLU — MXU matmul, scale pre-folded into w1 columns
        h1 = jnp.dot(x, w1_ref[...], preferred_element_type=jnp.float32)     # (M, 64)
        b1 = b_ref[0:1, 0:64]
        if epi_bf16:
            h1 = jnp.maximum(h1.astype(jnp.bfloat16) + b1.astype(jnp.bfloat16), 0.0)
        else:
            h1 = jnp.maximum(h1 + b1, 0.0).astype(jnp.bfloat16)

        # conv2 (1x1) + BN2 + ReLU — bf16 MXU, f32 accumulate
        h2 = jnp.dot(h1, w2_ref[...], preferred_element_type=jnp.float32)    # (M, 128)
        b2 = b_ref[1:2, 0:128]
        if epi_bf16:
            h2 = jnp.maximum(h2.astype(jnp.bfloat16) + b2.astype(jnp.bfloat16), 0.0)
        else:
            h2 = jnp.maximum(h2 + b2, 0.0).astype(jnp.bfloat16)

        # conv3 (1x1) + BN3 (no ReLU before the max, per the module)
        h3 = jnp.dot(h2, w3_ref[...], preferred_element_type=jnp.float32)    # (M, C)
        h3 = h3 + b_ref[2:3, :]

        # running max over points (torch.max(x, 2))
        tile_max = jnp.max(h3.reshape(bt, tn, c), axis=1)                    # (Bt, C)
        gmax_ref[...] = jnp.maximum(gmax_ref[...], tile_max)

        # finalize: lin + BN4 + ReLU, once per batch block on the pooled slab
        @pl.when(n == n_last)
        def _():
            g = gmax_ref[...]                                                # (Bt, C)
            h4 = jnp.dot(g.astype(jnp.bfloat16), wl_ref[...],
                         preferred_element_type=jnp.float32)                 # (Bt, C)
            o_ref[...] = jnp.maximum(h4 + b_ref[3:4, :], 0.0).astype(o_ref.dtype)

    return kernel


# ----------------------------------------------------------------- folding / sizing

def _fold_params(params):
    """Fold eval-mode BN (+ conv/linear biases) into the weights/biases.

    Scales are folded column-wise into the weight matrices IN F32 before the bf16
    cast; only the per-channel biases remain, packed into an (8, C) f32 slab.
    """
    def fold(lin_bias, stats):
        gamma, beta, mean, var = stats
        scale = gamma / jnp.sqrt(var + BN_EPS)
        bias = (lin_bias - mean) * scale + beta
        return scale, bias

    s1, b1 = fold(params["cb1"], params["bn1"])
    s2, b2 = fold(params["cb2"], params["bn2"])
    s3, b3 = fold(params["cb3"], params["bn3"])
    s4, b4 = fold(params["lb"], params["bn4"])

    C = params["w3"].shape[1]
    w1s = (params["w1"] * s1[None, :]).astype(jnp.bfloat16)    # (3, 64)
    w2s = (params["w2"] * s2[None, :]).astype(jnp.bfloat16)    # (64, 128)
    w3s = (params["w3"] * s3[None, :]).astype(jnp.bfloat16)    # (128, C)
    wls = (params["wl"] * s4[None, :]).astype(jnp.bfloat16)    # (C, C)

    pad = lambda v: jnp.pad(v, (0, C - v.shape[0]))
    bias = jnp.concatenate(
        [jnp.stack([pad(b1), pad(b2), b3, b4], axis=0),
         jnp.zeros((4, C), jnp.float32)], axis=0)              # (8, C)
    return w1s, w2s, w3s, wls, bias


def _device_vmem_bytes():
    try:
        return int(pltpu.get_tpu_info().vmem_capacity_bytes)
    except Exception:
        return 64 * 1024 * 1024    # conservative default (v7x per-TC VMEM)


def _use_bf16_epilogue():
    """bf16 VALU exists on v6e/v7x; run the epilogue in f32 on older generations."""
    try:
        kind = jax.devices()[0].device_kind.lower()
    except Exception:
        return True
    return not any(t in kind for t in ("v2", "v3", "v4", "v5"))


def _choose_bt(batch):
    """Rows per batch block: prefer full-sublane 8, else the largest divisor of B."""
    for bt in (8, 4, 2, 1):
        if batch % bt == 0:
            return bt
    return 1


def _footprint_bytes(bt, tn, c, epi_bf16):
    """Rough per-step VMEM footprint (pipeline buffers + kernel temporaries)."""
    m = bt * tn
    x_blk = 2 * bt * tn * 128 * 4                       # last dim 3 pads to 128 lanes; 2 bufs
    weights = 2 * ((8 * 64 + 64 * 128 + 128 * c + c * c) * 2 + 8 * c * 4)
    out_acc = 3 * bt * c * 4                            # output double-buffer + gmax scratch
    esz = 2 if epi_bf16 else 4
    temps = m * 64 * (4 + esz) + m * 128 * (4 + esz) + m * c * 4 + bt * c * 4
    return x_blk + weights + out_acc + temps


def _choose_tn(npoint, bt, c, epi_bf16, vmem_bytes):
    """Largest point tile that fits half the chip's VMEM (keeps M = bt*tn large)."""
    budget = vmem_bytes // 2
    n8 = max(8, ((npoint + 7) // 8) * 8)
    for tn in (2048, 1024, 512, 256, 128, 64, 32, 16, 8):
        if tn <= n8 and _footprint_bytes(bt, tn, c, epi_bf16) <= budget:
            return tn
    return 8


# ---------------------------------------------------------------------- entry point

def pointnet_feat(x, params):
    """x: (B, N, 3) float32. Returns (B, c_dim) float32 (eval-mode BN folded)."""
    B, N, _ = x.shape
    C = params["w3"].shape[1]
    assert C >= 128, "bias slab packing assumes c_dim >= 128"

    w1s, w2s, w3s, wls, bias = _fold_params(params)
    epi_bf16 = _use_bf16_epilogue()

    vmem_cap = _device_vmem_bytes()
    bt = _choose_bt(B)
    tn = _choose_tn(N, bt, C, epi_bf16, vmem_cap)

    # pad N up to a multiple of tn with a replicated last point (does not change the max)
    n_pad = int(pl.cdiv(N, tn)) * tn
    if n_pad != N:
        x = jnp.concatenate(
            [x, jnp.broadcast_to(x[:, -1:, :], (B, n_pad - N, 3))], axis=1)

    grid = (B // bt, n_pad // tn)

    fp = _footprint_bytes(bt, tn, C, epi_bf16)
    vmem_limit = int(min(vmem_cap - vmem_cap // 8,
                         max(32 * 1024 * 1024, 2 * fp)))

    const = lambda arr: pl.BlockSpec(arr.shape, lambda b, n: (0, 0))

    flops = 2 * B * n_pad * (3 * 64 + 64 * 128 + 128 * C) + 2 * B * C * C
    bytes_accessed = (x.size * 4
                      + (w1s.size + w2s.size + w3s.size + wls.size) * 2
                      + bias.size * 4 + B * C * 4)
    cost = pl.CostEstimate(flops=int(flops), transcendentals=0,
                           bytes_accessed=int(bytes_accessed))

    out = pl.pallas_call(
        _make_kernel(epi_bf16),
        out_shape=jax.ShapeDtypeStruct((B, C), jnp.float32),
        grid_spec=pltpu.PrefetchScalarGridSpec(
            num_scalar_prefetch=0,
            grid=grid,
            in_specs=[
                pl.BlockSpec((bt, tn, 3), lambda b, n: (b, n, 0)),
                const(w1s), const(w2s), const(w3s), const(wls), const(bias),
            ],
            out_specs=pl.BlockSpec((bt, C), lambda b, n: (b, 0)),
            scratch_shapes=[pltpu.VMEM((bt, C), jnp.float32)],
        ),
        compiler_params=pltpu.CompilerParams(
            dimension_semantics=("parallel", "arbitrary"),
            vmem_limit_bytes=vmem_limit,
        ),
        cost_estimate=cost,
    )(x, w1s, w2s, w3s, wls, bias)
    return out


# ------------------------------------------------------------------------ reference

def _reference(x, params):
    """Pure-JAX reference mirroring the PyTorch forward (eval-mode BN) with the
    exact same folded weights and mixed-precision policy as the kernel."""
    w1s, w2s, w3s, wls, bias = _fold_params(params)
    epi_bf16 = _use_bf16_epilogue()
    bf = jnp.bfloat16
    b1 = bias[0:1, 0:64]
    b2 = bias[1:2, 0:128]
    b3 = bias[2:3, :]
    b4 = bias[3:4, :]

    h1 = jnp.einsum("bnc,cd->bnd", x.astype(bf), w1s,
                    preferred_element_type=jnp.float32)
    if epi_bf16:
        h1 = jnp.maximum(h1.astype(bf) + b1.astype(bf), 0.0)
    else:
        h1 = jnp.maximum(h1 + b1, 0.0).astype(bf)

    h2 = jnp.einsum("bnc,cd->bnd", h1, w2s, preferred_element_type=jnp.float32)
    if epi_bf16:
        h2 = jnp.maximum(h2.astype(bf) + b2.astype(bf), 0.0)
    else:
        h2 = jnp.maximum(h2 + b2, 0.0).astype(bf)

    h3 = jnp.einsum("bnc,cd->bnd", h2, w3s, preferred_element_type=jnp.float32) + b3
    g = jnp.max(h3, axis=1)                                        # (B, C)
    h4 = jnp.dot(g.astype(bf), wls, preferred_element_type=jnp.float32)
    return jnp.maximum(h4 + b4, 0.0)


# --------------------------------------------------------------------------- params

def _init_params(key, c_dim):
    ks = jax.random.split(key, 16)

    def bn_stats(k, c):
        k1, k2, k3, k4 = jax.random.split(k, 4)
        gamma = 1.0 + 0.1 * jax.random.normal(k1, (c,), jnp.float32)
        beta = 0.1 * jax.random.normal(k2, (c,), jnp.float32)
        mean = 0.1 * jax.random.normal(k3, (c,), jnp.float32)
        var = jax.random.uniform(k4, (c,), jnp.float32, 0.5, 1.5)
        return (gamma, beta, mean, var)

    return {
        # conv weights stored as (C_in, C_out) so the kernel does (M, Cin) @ (Cin, Cout)
        "w1": 0.2 * jax.random.normal(ks[0], (3, 64), jnp.float32),
        "cb1": 0.05 * jax.random.normal(ks[1], (64,), jnp.float32),
        "w2": 0.1 * jax.random.normal(ks[2], (64, 128), jnp.float32),
        "cb2": 0.05 * jax.random.normal(ks[3], (128,), jnp.float32),
        "w3": 0.1 * jax.random.normal(ks[4], (128, c_dim), jnp.float32),
        "cb3": 0.05 * jax.random.normal(ks[5], (c_dim,), jnp.float32),
        "wl": 0.05 * jax.random.normal(ks[6], (c_dim, c_dim), jnp.float32),
        "lb": 0.05 * jax.random.normal(ks[7], (c_dim,), jnp.float32),
        "bn1": bn_stats(ks[8], 64),
        "bn2": bn_stats(ks[9], 128),
        "bn3": bn_stats(ks[10], c_dim),
        "bn4": bn_stats(ks[11], c_dim),
    }


if __name__ == "__main__":
    B, N, C_DIM = 2, 128, 256   # small shapes: batch=2, npoint=128, c_dim=256

    key = jax.random.PRNGKey(0)
    x = jax.random.normal(key, (B, N, 3), jnp.float32)       # (B, npoint, 3) point cloud
    params = _init_params(jax.random.PRNGKey(42), C_DIM)

    out = jax.block_until_ready(pointnet_feat(x, params))

    ref = _reference(x, params)
    assert out.shape == (B, C_DIM)
    assert jnp.allclose(out, ref, atol=1e-2, rtol=1e-2), "mismatch vs reference"

    print("KERNEL_OK")
</pallas_src>

<mosaic_0001>
module attributes {stable_mosaic.version = 11 : i64} {
  func.func @kernel(%arg0: i32, %arg1: i32, %arg2: memref<2x128x3xf32, #tpu.memory_space<vmem>>, %arg3: memref<3x64xbf16, #tpu.memory_space<vmem>>, %arg4: memref<64x128xbf16, #tpu.memory_space<vmem>>, %arg5: memref<128x256xbf16, #tpu.memory_space<vmem>>, %arg6: memref<256x256xbf16, #tpu.memory_space<vmem>>, %arg7: memref<8x256xf32, #tpu.memory_space<vmem>>, %arg8: memref<2x256xf32, #tpu.memory_space<vmem>>, %arg9: memref<2x256xf32, #tpu.memory_space<vmem>>) attributes {dimension_semantics = [#tpu.dimension_semantics<parallel>, #tpu.dimension_semantics<arbitrary>], iteration_bounds = array<i64: 1, 1>, scalar_prefetch = 0 : i64, scratch_operands = 1 : i64, tpu.core_type = #tpu.core_type<tc>, window_params = [{transform_indices = @transform_0, window_bounds = array<i64: 2, 128, 3>}, {pipeline_mode = #tpu.pipeline_mode<synchronous>, transform_indices = @transform_1, window_bounds = array<i64: 3, 64>}, {pipeline_mode = #tpu.pipeline_mode<synchronous>, transform_indices = @transform_2, window_bounds = array<i64: 64, 128>}, {pipeline_mode = #tpu.pipeline_mode<synchronous>, transform_indices = @transform_3, window_bounds = array<i64: 128, 256>}, {pipeline_mode = #tpu.pipeline_mode<synchronous>, transform_indices = @transform_4, window_bounds = array<i64: 256, 256>}, {pipeline_mode = #tpu.pipeline_mode<synchronous>, transform_indices = @transform_5, window_bounds = array<i64: 8, 256>}, {transform_indices = @transform_6, window_bounds = array<i64: 2, 256>}]} {
    %c0_i32 = arith.constant 0 : i32
    %0 = arith.cmpi eq, %arg1, %c0_i32 : i32
    %1 = arith.extui %0 : i1 to i32
    %c0_i32_0 = arith.constant 0 : i32
    %2 = arith.cmpi ne, %1, %c0_i32_0 : i32
    scf.if %2 {
      %cst_24 = arith.constant 0xFF800000 : f32
      %37 = vector.broadcast %cst_24 : f32 to vector<2x256xf32>
      %c0_25 = arith.constant 0 : index
      %c0_26 = arith.constant 0 : index
      %38 = vector.load %arg9[%c0_25, %c0_26] : memref<2x256xf32, #tpu.memory_space<vmem>>, vector<2x256xf32>
      tpu.vector_store %arg9[%c0_25, %c0_26], %37 {strides = array<i32>} : memref<2x256xf32, #tpu.memory_space<vmem>>, vector<2x256xf32>,
    } else {
    }
    %c0 = arith.constant 0 : index
    %c0_1 = arith.constant 0 : index
    %c0_2 = arith.constant 0 : index
    %3 = vector.load %arg2[%c0, %c0_1, %c0_2] : memref<2x128x3xf32, #tpu.memory_space<vmem>>, vector<2x128x3xf32>
    %4 = vector.shape_cast %3 : vector<2x128x3xf32> to vector<256x3xf32>
    %5 = arith.truncf %4 : vector<256x3xf32> to vector<256x3xbf16>
    %c0_3 = arith.constant 0 : index
    %c0_4 = arith.constant 0 : index
    %6 = vector.load %arg3[%c0_3, %c0_4] : memref<3x64xbf16, #tpu.memory_space<vmem>>, vector<3x64xbf16>
    %cst = arith.constant dense<0.000000e+00> : vector<256x64xf32>
    %7 = tpu.matmul %5, %6, %cst {dimension_numbers = #tpu.dot_dimension_numbers<[1], [0], [0], [1], [0, 0, 1, 1], [], []>} : vector<256x3xbf16>, vector<3x64xbf16>, vector<256x64xf32> -> vector<256x64xf32>
    %c0_5 = arith.constant 0 : index
    %c0_6 = arith.constant 0 : index
    %8 = vector.load %arg7[%c0_5, %c0_6] : memref<8x256xf32, #tpu.memory_space<vmem>>, vector<1x64xf32>
    %9 = arith.truncf %7 : vector<256x64xf32> to vector<256x64xbf16>
    %10 = arith.truncf %8 : vector<1x64xf32> to vector<1x64xbf16>
    %11 = vector.broadcast %10 : vector<1x64xbf16> to vector<256x64xbf16>
    %12 = arith.addf %9, %11 : vector<256x64xbf16>
    %cst_7 = arith.constant 0.000000e+00 : bf16
    %13 = vector.broadcast %cst_7 : bf16 to vector<256x64xbf16>
    %14 = arith.maximumf %12, %13 : vector<256x64xbf16>
    %c0_8 = arith.constant 0 : index
    %c0_9 = arith.constant 0 : index
    %15 = vector.load %arg4[%c0_8, %c0_9] : memref<64x128xbf16, #tpu.memory_space<vmem>>, vector<64x128xbf16>
    %cst_10 = arith.constant dense<0.000000e+00> : vector<256x128xf32>
    %16 = tpu.matmul %14, %15, %cst_10 {dimension_numbers = #tpu.dot_dimension_numbers<[1], [0], [0], [1], [0, 0, 1, 1], [], []>} : vector<256x64xbf16>, vector<64x128xbf16>, vector<256x128xf32> -> vector<256x128xf32>
    %c1 = arith.constant 1 : index
    %c0_11 = arith.constant 0 : index
    %17 = vector.load %arg7[%c1, %c0_11] : memref<8x256xf32, #tpu.memory_space<vmem>>, vector<1x128xf32>
    %18 = arith.truncf %16 : vector<256x128xf32> to vector<256x128xbf16>
    %19 = arith.truncf %17 : vector<1x128xf32> to vector<1x128xbf16>
    %20 = vector.broadcast %19 : vector<1x128xbf16> to vector<256x128xbf16>
    %21 = arith.addf %18, %20 : vector<256x128xbf16>
    %cst_12 = arith.constant 0.000000e+00 : bf16
    %22 = vector.broadcast %cst_12 : bf16 to vector<256x128xbf16>
    %23 = arith.maximumf %21, %22 : vector<256x128xbf16>
    %c0_13 = arith.constant 0 : index
    %c0_14 = arith.constant 0 : index
    %24 = vector.load %arg5[%c0_13, %c0_14] : memref<128x256xbf16, #tpu.memory_space<vmem>>, vector<128x256xbf16>
    %cst_15 = arith.constant dense<0.000000e+00> : vector<256x256xf32>
    %25 = tpu.matmul %23, %24, %cst_15 {dimension_numbers = #tpu.dot_dimension_numbers<[1], [0], [0], [1], [0, 0, 1, 1], [], []>} : vector<256x128xbf16>, vector<128x256xbf16>, vector<256x256xf32> -> vector<256x256xf32>
    %c2 = arith.constant 2 : index
    %c0_16 = arith.constant 0 : index
    %26 = vector.load %arg7[%c2, %c0_16] : memref<8x256xf32, #tpu.memory_space<vmem>>, vector<1x256xf32>
    %27 = vector.broadcast %26 : vector<1x256xf32> to vector<256x256xf32>
    %28 = arith.addf %25, %27 : vector<256x256xf32>
    %29 = vector.shape_cast %28 : vector<256x256xf32> to vector<2x128x256xf32>
    %cst_17 = arith.constant dense<0xFF800000> : vector<2x256xf32>
    %30 = vector.multi_reduction <maximumf>, %29, %cst_17 [1] : vector<2x128x256xf32> to vector<2x256xf32>
    %c0_18 = arith.constant 0 : index
    %c0_19 = arith.constant 0 : index
    %31 = vector.load %arg9[%c0_18, %c0_19] : memref<2x256xf32, #tpu.memory_space<vmem>>, vector<2x256xf32>
    %32 = arith.maximumf %31, %30 : vector<2x256xf32>
    %c0_20 = arith.constant 0 : index
    %c0_21 = arith.constant 0 : index
    %33 = vector.load %arg9[%c0_20, %c0_21] : memref<2x256xf32, #tpu.memory_space<vmem>>, vector<2x256xf32>
    tpu.vector_store %arg9[%c0_20, %c0_21], %32 {strides = array<i32>} : memref<2x256xf32, #tpu.memory_space<vmem>>, vector<2x256xf32>,
    %c0_i32_22 = arith.constant 0 : i32
    %34 = arith.cmpi eq, %arg1, %c0_i32_22 : i32
    %35 = arith.extui %34 : i1 to i32
    %c0_i32_23 = arith.constant 0 : i32
    %36 = arith.cmpi ne, %35, %c0_i32_23 : i32
    scf.if %36 {
      %c0_24 = arith.constant 0 : index
      %c0_25 = arith.constant 0 : index
      %37 = vector.load %arg9[%c0_24, %c0_25] : memref<2x256xf32, #tpu.memory_space<vmem>>, vector<2x256xf32>
      %38 = arith.truncf %37 : vector<2x256xf32> to vector<2x256xbf16>
      %c0_26 = arith.constant 0 : index
      %c0_27 = arith.constant 0 : index
      %39 = vector.load %arg6[%c0_26, %c0_27] : memref<256x256xbf16, #tpu.memory_space<vmem>>, vector<256x256xbf16>
      %cst_28 = arith.constant dense<0.000000e+00> : vector<2x256xf32>
      %40 = tpu.matmul %38, %39, %cst_28 {dimension_numbers = #tpu.dot_dimension_numbers<[1], [0], [0], [1], [0, 0, 1, 1], [], []>} : vector<2x256xbf16>, vector<256x256xbf16>, vector<2x256xf32> -> vector<2x256xf32>
      %c3 = arith.constant 3 : index
      %c0_29 = arith.constant 0 : index
      %41 = vector.load %arg7[%c3, %c0_29] : memref<8x256xf32, #tpu.memory_space<vmem>>, vector<1x256xf32>
      %42 = vector.broadcast %41 : vector<1x256xf32> to vector<2x256xf32>
      %43 = arith.addf %40, %42 : vector<2x256xf32>
      %cst_30 = arith.constant 0.000000e+00 : f32
      %44 = vector.broadcast %cst_30 : f32 to vector<2x256xf32>
      %45 = arith.maximumf %43, %44 : vector<2x256xf32>
      %c0_31 = arith.constant 0 : index
      %c0_32 = arith.constant 0 : index
      %46 = vector.load %arg8[%c0_31, %c0_32] : memref<2x256xf32, #tpu.memory_space<vmem>>, vector<2x256xf32>
      tpu.vector_store %arg8[%c0_31, %c0_32], %45 {strides = array<i32>} : memref<2x256xf32, #tpu.memory_space<vmem>>, vector<2x256xf32>,
    } else {
    }
    return
  }
  func.func @transform_0(%arg0: i32, %arg1: i32) -> (i32, i32, i32) {
    %c0_i32 = arith.constant 0 : i32
    %c0_i32_0 = arith.constant 0 : i32
    return %arg0, %arg1, %c0_i32 : i32, i32, i32
  }
  func.func @transform_1(%arg0: i32, %arg1: i32) -> (i32, i32) {
    %c0_i32 = arith.constant 0 : i32
    %c0_i32_0 = arith.constant 0 : i32
    %c0_i32_1 = arith.constant 0 : i32
    return %c0_i32, %c0_i32_0 : i32, i32
  }
  func.func @transform_2(%arg0: i32, %arg1: i32) -> (i32, i32) {
    %c0_i32 = arith.constant 0 : i32
    %c0_i32_0 = arith.constant 0 : i32
    %c0_i32_1 = arith.constant 0 : i32
    return %c0_i32, %c0_i32_0 : i32, i32
  }
  func.func @transform_3(%arg0: i32, %arg1: i32) -> (i32, i32) {
    %c0_i32 = arith.constant 0 : i32
    %c0_i32_0 = arith.constant 0 : i32
    %c0_i32_1 = arith.constant 0 : i32
    return %c0_i32, %c0_i32_0 : i32, i32
  }
  func.func @transform_4(%arg0: i32, %arg1: i32) -> (i32, i32) {
    %c0_i32 = arith.constant 0 : i32
    %c0_i32_0 = arith.constant 0 : i32
    %c0_i32_1 = arith.constant 0 : i32
    return %c0_i32, %c0_i32_0 : i32, i32
  }
  func.func @transform_5(%arg0: i32, %arg1: i32) -> (i32, i32) {
    %c0_i32 = arith.constant 0 : i32
    %c0_i32_0 = arith.constant 0 : i32
    %c0_i32_1 = arith.constant 0 : i32
    return %c0_i32, %c0_i32_0 : i32, i32
  }
  func.func @transform_6(%arg0: i32, %arg1: i32) -> (i32, i32) {
    %c0_i32 = arith.constant 0 : i32
    %c0_i32_0 = arith.constant 0 : i32
    return %arg0, %c0_i32 : i32, i32
  }
}

</mosaic_0001>

<llo_original>
// kernel: tpu_custom_call.1
$region0: #{tpu_custom_call.1}
  #allocation0 [shape = 'u32[]', space=smem, size = 0x4, offset = 0x4, fixed_abs, tag = 'smem constant byte address 0x4 - core index']
  #allocation1 [shape = 'u32[144,128]{1,0:T(1,128)}', space=vmem, size = 0x12000, scoped, tag = 'internal scratch']
  #allocation2 [shape = 'f32[2,256]{1,0:T(2,128)}', space=vmem, size = 0x800, scoped, tag = 'scratch operand']
  %s0 = inlined_call_operand.vmem [shape: f32[2,128,3], index: 0, kind: input, shape index: {}]
  %s1 = inlined_call_operand.vmem [shape: bf16[3,64], index: 1, kind: input, shape index: {}]
  %s2 = inlined_call_operand.hbm [shape: bf16[64,128], index: 2, kind: input, shape index: {}]
  %s3 = inlined_call_operand.hbm [shape: bf16[128,256], index: 3, kind: input, shape index: {}]
  %s4 = inlined_call_operand.vmem [shape: bf16[256,256], index: 4, kind: input, shape index: {}]
  %s5 = inlined_call_operand.vmem [shape: f32[8,256], index: 5, kind: input, shape index: {}]
  %s6 = inlined_call_operand.hbm [shape: f32[2,256], index: 6, kind: output, shape index: {}]
  %s7 = sld [smem:[#allocation0]]
  $region50: #{tpu_custom_call.1} parent=0
    _
  %s9 = ssub.s32 1, %s7
  %s10 = scalar_select 0, %s9, %s7
  $region1: #{tpu_custom_call.1} parent=0
    #allocation3 [shape = 'u8[16384]{0}', space=vmem, size = 0x4000, scoped, tag = 'input window, operand 2, single buffered']
    #allocation4 [shape = 's32[1]{0}', space=sflag, size = 0x4, scoped, tag = 'scoped memory for tpu_custom_call.1']
    #allocation5 [shape = 's32[1]{0}', space=sflag, size = 0x4, scoped, tag = 'scoped memory for tpu_custom_call.1']
    #allocation6 [shape = 'u8[65536]{0}', space=vmem, size = 0x10000, scoped, tag = 'input window, operand 3, single buffered']
    #allocation7 [shape = 's32[1]{0}', space=sflag, size = 0x4, scoped, tag = 'scoped memory for tpu_custom_call.1']
    #allocation8 [shape = 'u8[2048]{0}', space=vmem, size = 0x800, scoped, tag = 'output window, operand 0, single buffered']
    %11 = vsyncpa [#allocation4], 0
    %12 = vsyncpa [#allocation7], 0
    %13 = vsyncpa [#allocation5], 0
    // Predicated region
    $region2: #{tpu_custom_call.1} parent=1 // pred_check
      _
    $region3: #{tpu_custom_call.1} parent=1 // pred_check_branch
      %15 = sbr.rel (0) target = $region5
    $region4: #{tpu_custom_call.1} parent=1 // pred_region
      _
    $region5: #{tpu_custom_call.1} parent=1 // pred_fallthru
      _
    // Predicated region
    $region6: #{tpu_custom_call.1} parent=1 // pred_check
      _
    $region7: #{tpu_custom_call.1} parent=1 // pred_check_branch
      %17 = sbr.rel (0) target = $region9
    $region8: #{tpu_custom_call.1} parent=1 // pred_region
      _
    $region9: #{tpu_custom_call.1} parent=1 // pred_fallthru
      _
    // Predicated region
    $region10: #{tpu_custom_call.1} parent=1 // pred_check
      _
    $region11: #{tpu_custom_call.1} parent=1 // pred_check_branch
      %19 = sbr.rel (0) target = $region13
    $region12: #{tpu_custom_call.1} parent=1 // pred_region
      %s21 = ssub.s32 512, 512
      %22 = vsyncadd [#allocation4], %s21
      %s23 = sshll.u32 [#allocation3], 4
      %s24 = int_to_ptr.vmem [resolvable:$true] %s23
      %29 = dma.hbm_to_vmem [thread:$0]  %s2, 512, %s24, [#allocation4], 64, 64, 4
    $region13: #{tpu_custom_call.1} parent=1 // pred_fallthru
      _
    // Predicated region
    $region14: #{tpu_custom_call.1} parent=1 // pred_check
      _
    $region15: #{tpu_custom_call.1} parent=1 // pred_check_branch
      %31 = sbr.rel (0) target = $region17
    $region16: #{tpu_custom_call.1} parent=1 // pred_region
      %s33 = ssub.s32 2048, 2048
      %34 = vsyncadd [#allocation7], %s33
      %s35 = sshll.u32 [#allocation6], 4
      %s36 = int_to_ptr.vmem [resolvable:$true] %s35
      %41 = dma.hbm_to_vmem [thread:$0]  %s3, 2048, %s36, [#allocation7], 128, 128, 8
    $region17: #{tpu_custom_call.1} parent=1 // pred_fallthru
      _
    // Predicated region
    $region18: #{tpu_custom_call.1} parent=1 // pred_check
      _
    $region19: #{tpu_custom_call.1} parent=1 // pred_check_branch
      %43 = sbr.rel (0) target = $region21
    $region20: #{tpu_custom_call.1} parent=1 // pred_region
      _
    $region21: #{tpu_custom_call.1} parent=1 // pred_fallthru
      _
    // Predicated region
    $region22: #{tpu_custom_call.1} parent=1 // pred_check
      _
    $region23: #{tpu_custom_call.1} parent=1 // pred_check_branch
      %45 = sbr.rel (0) target = $region25
    $region24: #{tpu_custom_call.1} parent=1 // pred_region
      _
    $region25: #{tpu_custom_call.1} parent=1 // pred_fallthru
      _
    // Predicated region
    $region26: #{tpu_custom_call.1} parent=1 // pred_check
      _
    $region27: #{tpu_custom_call.1} parent=1 // pred_check_branch
      %47 = sbr.rel (0) target = $region29
    $region28: #{tpu_custom_call.1} parent=1 // pred_region
      %48 = dma.done [#allocation4], 512
    $region29: #{tpu_custom_call.1} parent=1 // pred_fallthru
      _
    // Predicated region
    $region30: #{tpu_custom_call.1} parent=1 // pred_check
      _
    $region31: #{tpu_custom_call.1} parent=1 // pred_check_branch
      %50 = sbr.rel (0) target = $region33
    $region32: #{tpu_custom_call.1} parent=1 // pred_region
      %51 = dma.done [#allocation7], 2048
    $region33: #{tpu_custom_call.1} parent=1 // pred_fallthru
      _
    %p53 = scmp.eq.s32.totalorder 0, 0
    // Predicated region
    $region34: #{tpu_custom_call.1} parent=1 // pred_check
      %p54 = pneg %p53
    $region35: #{tpu_custom_call.1} parent=1 // pred_check_branch
      %56 = sbr.rel (%p54) target = $region37
    $region36: #{tpu_custom_call.1} parent=1 // pred_region
      %57 = vst [vmem:[#allocation2] sm:$0xf] -inf
    $region37: #{tpu_custom_call.1} parent=1 // pred_fallthru
      _
    %v58 = vld [vmem:[%s0] sm:$0xff]
    %v59 = vld [vmem:[%s0 + $0x8] sm:$0xff]
    %v60 = vld [vmem:[%s0 + $0x10] sm:$0xff]
    %v61 = vld [vmem:[%s0 + $0x18] sm:$0xff]
    %v62 = vld [vmem:[%s0 + $0x20] sm:$0xff]
    %v63 = vld [vmem:[%s0 + $0x28] sm:$0xff]
    %v64 = vld [vmem:[%s0 + $0x30] sm:$0xff]
    %v65 = vld [vmem:[%s0 + $0x38] sm:$0xff]
    %v66 = vld [vmem:[%s0 + $0x40] sm:$0xff]
    %v67 = vld [vmem:[%s0 + $0x48] sm:$0xff]
    %v68 = vld [vmem:[%s0 + $0x50] sm:$0xff]
    %v69 = vld [vmem:[%s0 + $0x58] sm:$0xff]
    %v70 = vld [vmem:[%s0 + $0x60] sm:$0xff]
    %v71 = vld [vmem:[%s0 + $0x68] sm:$0xff]
    %v72 = vld [vmem:[%s0 + $0x70] sm:$0xff]
    %v73 = vld [vmem:[%s0 + $0x78] sm:$0xff]
    %v74 = vld [vmem:[%s0 + $0x80] sm:$0xff]
    %v75 = vld [vmem:[%s0 + $0x88] sm:$0xff]
    %v76 = vld [vmem:[%s0 + $0x90] sm:$0xff]
    %v77 = vld [vmem:[%s0 + $0x98] sm:$0xff]
    %v78 = vld [vmem:[%s0 + $0xa0] sm:$0xff]
    %v79 = vld [vmem:[%s0 + $0xa8] sm:$0xff]
    %v80 = vld [vmem:[%s0 + $0xb0] sm:$0xff]
    %v81 = vld [vmem:[%s0 + $0xb8] sm:$0xff]
    %v82 = vld [vmem:[%s0 + $0xc0] sm:$0xff]
    %v83 = vld [vmem:[%s0 + $0xc8] sm:$0xff]
    %v84 = vld [vmem:[%s0 + $0xd0] sm:$0xff]
    %v85 = vld [vmem:[%s0 + $0xd8] sm:$0xff]
    %v86 = vld [vmem:[%s0 + $0xe0] sm:$0xff]
    %v87 = vld [vmem:[%s0 + $0xe8] sm:$0xff]
    %v88 = vld [vmem:[%s0 + $0xf0] sm:$0xff]
    %v89 = vld [vmem:[%s0 + $0xf8] sm:$0xff]
    %v90 = vpack.c.bf16 %v59, %v58
    %v91 = vpack.c.bf16 %v61, %v60
    %v92 = vpack.c.bf16 %v63, %v62
    %v93 = vpack.c.bf16 %v65, %v64
    %v94 = vpack.c.bf16 %v67, %v66
    %v95 = vpack.c.bf16 %v69, %v68
    %v96 = vpack.c.bf16 %v71, %v70
    %v97 = vpack.c.bf16 %v73, %v72
    %v98 = vpack.c.bf16 %v75, %v74
    %v99 = vpack.c.bf16 %v77, %v76
    %v100 = vpack.c.bf16 %v79, %v78
    %v101 = vpack.c.bf16 %v81, %v80
    %v102 = vpack.c.bf16 %v83, %v82
    %v103 = vpack.c.bf16 %v85, %v84
    %v104 = vpack.c.bf16 %v87, %v86
    %v105 = vpack.c.bf16 %v89, %v88
    %v106 = vld [vmem:[%s1] sm:$0x3]
    %vm107 = vcmask 23552
    %v109 = vsel %vm107, %v90, 0
    %v112 = vsel %vm107, %v91, 0
    %v115 = vsel %vm107, %v92, 0
    %v118 = vsel %vm107, %v93, 0
    %v121 = vsel %vm107, %v94, 0
    %v124 = vsel %vm107, %v95, 0
    %v127 = vsel %vm107, %v96, 0
    %v130 = vsel %vm107, %v97, 0
    %v133 = vsel %vm107, %v98, 0
    %v136 = vsel %vm107, %v99, 0
    %v139 = vsel %vm107, %v100, 0
    %v142 = vsel %vm107, %v101, 0
    %v145 = vsel %vm107, %v102, 0
    %v148 = vsel %vm107, %v103, 0
    %v151 = vsel %vm107, %v104, 0
    %v154 = vsel %vm107, %v105, 0
    %vm156 = vcmask 1040384
    %vm157 = vcmask 1041408
    %v158 = vsel %vm156, 4294967295, 65535
    %v159 = vsel %vm157, %v158, 0
    %v161 = vand.u32 %v106, %v159
    %163 = vmatprep.subr.bf16.mxu0 0
    %164 = vmatpush1.bf16.msra.mxu0 %v161
    %165 = vmatprep.subr.bf16.mxu0 0
    %166 = vmatpush1.bf16.msra.mxu0 0
    %167 = vmatprep.subr.bf16.mxu0 0
    %168 = vmatpush1.bf16.msra.mxu0 0
    %169 = vmatprep.subr.bf16.mxu0 0
    %170 = vmatpush1.bf16.msra.mxu0 0
    %171 = vmatprep.subr.bf16.mxu0 0
    %172 = vmatpush1.bf16.msra.mxu0 0
    %173 = vmatprep.subr.bf16.mxu0 0
    %174 = vmatpush1.bf16.msra.mxu0 0
    %175 = vmatprep.subr.bf16.mxu0 0
    %176 = vmatpush1.bf16.msra.mxu0 0
    %177 = vmatprep.subr.bf16.mxu0 0
    %178 = vmatpush1.bf16.msra.mxu0 0
    %179 = vmatprep.subr.bf16.mxu0 0
    %180 = vmatpush1.bf16.msra.mxu0 0
    %181 = vmatprep.subr.bf16.mxu0 0
    %182 = vmatpush1.bf16.msra.mxu0 0
    %183 = vmatprep.subr.bf16.mxu0 0
    %184 = vmatpush1.bf16.msra.mxu0 0
    %185 = vmatprep.subr.bf16.mxu0 0
    %186 = vmatpush1.bf16.msra.mxu0 0
    %187 = vmatprep.subr.bf16.mxu0 0
    %188 = vmatpush1.bf16.msra.mxu0 0
    %189 = vmatprep.subr.bf16.mxu0 0
    %190 = vmatpush1.bf16.msra.mxu0 0
    %191 = vmatprep.subr.bf16.mxu0 0
    %192 = vmatpush1.bf16.msra.mxu0 0
    %193 = vmatprep.subr.bf16.mxu0 0
    %194 = vmatpush1.bf16.msra.mxu0 0
    %195 = vmatprep.mubr.bf16.mxu0 0
    %196 = vmatmul.mubr.bf16.gmra.mrb[0].mxu0 %v109
    %v197 = vpop.f32.mrb[0].mxu0
    %v198 = vadd.f32 0.0, %v197
    %v199 = vpop.f32.mrb[0].mxu0
    %v200 = vpop.f32.mrb[0].mxu0
    %v201 = vadd.f32 0.0, %v200
    %v202 = vpop.f32.mrb[0].mxu0
    %203 = vmatprep.mubr.bf16.mxu0 0
    %204 = vmatmul.mubr.bf16.gmra.mrb[0].mxu0 %v112
    %v205 = vpop.f32.mrb[0].mxu0
    %v206 = vadd.f32 0.0, %v205
    %v207 = vpop.f32.mrb[0].mxu0
    %v208 = vpop.f32.mrb[0].mxu0
    %v209 = vadd.f32 0.0, %v208
    %v210 = vpop.f32.mrb[0].mxu0
    %211 = vmatprep.mubr.bf16.mxu0 0
    %212 = vmatmul.mubr.bf16.gmra.mrb[0].mxu0 %v115
    %v213 = vpop.f32.mrb[0].mxu0
    %v214 = vadd.f32 0.0, %v213
    %v215 = vpop.f32.mrb[0].mxu0
    %v216 = vpop.f32.mrb[0].mxu0
    %v217 = vadd.f32 0.0, %v216
    %v218 = vpop.f32.mrb[0].mxu0
    %219 = vmatprep.mubr.bf16.mxu0 0
    %220 = vmatmul.mubr.bf16.gmra.mrb[0].mxu0 %v118
    %v221 = vpop.f32.mrb[0].mxu0
    %v222 = vadd.f32 0.0, %v221
    %v223 = vpop.f32.mrb[0].mxu0
    %v224 = vpop.f32.mrb[0].mxu0
    %v225 = vadd.f32 0.0, %v224
    %v226 = vpop.f32.mrb[0].mxu0
    %227 = vmatprep.mubr.bf16.mxu0 0
    %228 = vmatmul.mubr.bf16.gmra.mrb[0].mxu0 %v121
    %v229 = vpop.f32.mrb[0].mxu0
    %v230 = vadd.f32 0.0, %v229
    %v231 = vpop.f32.mrb[0].mxu0
    %v232 = vpop.f32.mrb[0].mxu0
    %v233 = vadd.f32 0.0, %v232
    %v234 = vpop.f32.mrb[0].mxu0
    %235 = vmatprep.mubr.bf16.mxu0 0
    %236 = vmatmul.mubr.bf16.gmra.mrb[0].mxu0 %v124
    %v237 = vpop.f32.mrb[0].mxu0
    %v238 = vadd.f32 0.0, %v237
    %v239 = vpop.f32.mrb[0].mxu0
    %v240 = vpop.f32.mrb[0].mxu0
    %v241 = vadd.f32 0.0, %v240
    %v242 = vpop.f32.mrb[0].mxu0
    %243 = vmatprep.mubr.bf16.mxu0 0
    %244 = vmatmul.mubr.bf16.gmra.mrb[0].mxu0 %v127
    %v245 = vpop.f32.mrb[0].mxu0
    %v246 = vadd.f32 0.0, %v245
    %v247 = vpop.f32.mrb[0].mxu0
    %v248 = vpop.f32.mrb[0].mxu0
    %v249 = vadd.f32 0.0, %v248
    %v250 = vpop.f32.mrb[0].mxu0
    %251 = vmatprep.mubr.bf16.mxu0 0
    %252 = vmatmul.mubr.bf16.gmra.mrb[0].mxu0 %v130
    %v253 = vpop.f32.mrb[0].mxu0
    %v254 = vadd.f32 0.0, %v253
    %v255 = vpop.f32.mrb[0].mxu0
    %v256 = vpop.f32.mrb[0].mxu0
    %v257 = vadd.f32 0.0, %v256
    %v258 = vpop.f32.mrb[0].mxu0
    %259 = vmatprep.mubr.bf16.mxu0 0
    %260 = vmatmul.mubr.bf16.gmra.mrb[0].mxu0 %v133
    %v261 = vpop.f32.mrb[0].mxu0
    %v262 = vadd.f32 0.0, %v261
    %v263 = vpop.f32.mrb[0].mxu0
    %v264 = vpop.f32.mrb[0].mxu0
    %v265 = vadd.f32 0.0, %v264
    %v266 = vpop.f32.mrb[0].mxu0
    %267 = vmatprep.mubr.bf16.mxu0 0
    %268 = vmatmul.mubr.bf16.gmra.mrb[0].mxu0 %v136
    %v269 = vpop.f32.mrb[0].mxu0
    %v270 = vadd.f32 0.0, %v269
    %v271 = vpop.f32.mrb[0].mxu0
    %v272 = vpop.f32.mrb[0].mxu0
    %v273 = vadd.f32 0.0, %v272
    %v274 = vpop.f32.mrb[0].mxu0
    %275 = vmatprep.mubr.bf16.mxu0 0
    %276 = vmatmul.mubr.bf16.gmra.mrb[0].mxu0 %v139
    %v277 = vpop.f32.mrb[0].mxu0
    %v278 = vadd.f32 0.0, %v277
    %v279 = vpop.f32.mrb[0].mxu0
    %v280 = vpop.f32.mrb[0].mxu0
    %v281 = vadd.f32 0.0, %v280
    %v282 = vpop.f32.mrb[0].mxu0
    %283 = vmatprep.mubr.bf16.mxu0 0
    %284 = vmatmul.mubr.bf16.gmra.mrb[0].mxu0 %v142
    %v285 = vpop.f32.mrb[0].mxu0
    %v286 = vadd.f32 0.0, %v285
    %v287 = vpop.f32.mrb[0].mxu0
    %v288 = vpop.f32.mrb[0].mxu0
    %v289 = vadd.f32 0.0, %v288
    %v290 = vpop.f32.mrb[0].mxu0
    %291 = vmatprep.mubr.bf16.mxu0 0
    %292 = vmatmul.mubr.bf16.gmra.mrb[0].mxu0 %v145
    %v293 = vpop.f32.mrb[0].mxu0
    %v294 = vadd.f32 0.0, %v293
    %v295 = vpop.f32.mrb[0].mxu0
    %v296 = vpop.f32.mrb[0].mxu0
    %v297 = vadd.f32 0.0, %v296
    %v298 = vpop.f32.mrb[0].mxu0
    %299 = vmatprep.mubr.bf16.mxu0 0
    %300 = vmatmul.mubr.bf16.gmra.mrb[0].mxu0 %v148
    %v301 = vpop.f32.mrb[0].mxu0
    %v302 = vadd.f32 0.0, %v301
    %v303 = vpop.f32.mrb[0].mxu0
    %v304 = vpop.f32.mrb[0].mxu0
    %v305 = vadd.f32 0.0, %v304
    %v306 = vpop.f32.mrb[0].mxu0
    %307 = vmatprep.mubr.bf16.mxu0 0
    %308 = vmatmul.mubr.bf16.gmra.mrb[0].mxu0 %v151
    %v309 = vpop.f32.mrb[0].mxu0
    %v310 = vadd.f32 0.0, %v309
    %v311 = vpop.f32.mrb[0].mxu0
    %v312 = vpop.f32.mrb[0].mxu0
    %v313 = vadd.f32 0.0, %v312
    %v314 = vpop.f32.mrb[0].mxu0
    %315 = vmatprep.mubr.bf16.mxu0 0
    %316 = vmatmul.mubr.bf16.gmra.mrb[0].mxu0 %v154
    %v317 = vpop.f32.mrb[0].mxu0
    %v318 = vadd.f32 0.0, %v317
    %v319 = vpop.f32.mrb[0].mxu0
    %v320 = vpop.f32.mrb[0].mxu0
    %v321 = vadd.f32 0.0, %v320
    %v322 = vpop.f32.mrb[0].mxu0
    %323 = vdwg.mxu0
    %v324 = vld [vmem:[%s5] ss:$0 sm:$0xff]
    %v325 = vpack.c.bf16 %v201, %v198
    %v326 = vpack.c.bf16 %v209, %v206
    %v327 = vpack.c.bf16 %v217, %v214
    %v328 = vpack.c.bf16 %v225, %v222
    %v329 = vpack.c.bf16 %v233, %v230
    %v330 = vpack.c.bf16 %v241, %v238
    %v331 = vpack.c.bf16 %v249, %v246
    %v332 = vpack.c.bf16 %v257, %v254
    %v333 = vpack.c.bf16 %v265, %v262
    %v334 = vpack.c.bf16 %v273, %v270
    %v335 = vpack.c.bf16 %v281, %v278
    %v336 = vpack.c.bf16 %v289, %v286
    %v337 = vpack.c.bf16 %v297, %v294
    %v338 = vpack.c.bf16 %v305, %v302
    %v339 = vpack.c.bf16 %v313, %v310
    %v340 = vpack.c.bf16 %v321, %v318
    %v341 = vpack.c.bf16 %v324, %v324
    %v342 = vadd.bf16 %v325, %v341
    %v343 = vadd.bf16 %v326, %v341
    %v344 = vadd.bf16 %v327, %v341
    %v345 = vadd.bf16 %v328, %v341
    %v346 = vadd.bf16 %v329, %v341
    %v347 = vadd.bf16 %v330, %v341
    %v348 = vadd.bf16 %v331, %v341
    %v349 = vadd.bf16 %v332, %v341
    %v350 = vadd.bf16 %v333, %v341
    %v351 = vadd.bf16 %v334, %v341
    %v352 = vadd.bf16 %v335, %v341
    %v353 = vadd.bf16 %v336, %v341
    %v354 = vadd.bf16 %v337, %v341
    %v355 = vadd.bf16 %v338, %v341
    %v356 = vadd.bf16 %v339, %v341
    %v357 = vadd.bf16 %v340, %v341
    %v358 = vmax.bf16 %v342, 0
    %v359 = vmax.bf16 %v343, 0
    %v360 = vmax.bf16 %v344, 0
    %v361 = vmax.bf16 %v345, 0
    %v362 = vmax.bf16 %v346, 0
    %v363 = vmax.bf16 %v347, 0
    %v364 = vmax.bf16 %v348, 0
    %v365 = vmax.bf16 %v349, 0
    %v366 = vmax.bf16 %v350, 0
    %v367 = vmax.bf16 %v351, 0
    %v368 = vmax.bf16 %v352, 0
    %v369 = vmax.bf16 %v353, 0
    %v370 = vmax.bf16 %v354, 0
    %v371 = vmax.bf16 %v355, 0
    %v372 = vmax.bf16 %v356, 0
    %v373 = vmax.bf16 %v357, 0
    %v374 = vld [vmem:[#allocation3] sm:$0xf]
    %v375 = vld [vmem:[#allocation3 + $0x4] sm:$0xf]
    %v376 = vld [vmem:[#allocation3 + $0x8] sm:$0xf]
    %v377 = vld [vmem:[#allocation3 + $0xc] sm:$0xf]
    %v378 = vld [vmem:[#allocation3 + $0x10] sm:$0xf]
    %v379 = vld [vmem:[#allocation3 + $0x14] sm:$0xf]
    %v380 = vld [vmem:[#allocation3 + $0x18] sm:$0xf]
    %v381 = vld [vmem:[#allocation3 + $0x1c] sm:$0xf]
    %v390 = vunpack.c.l.b16 %v374
    %v391 = vunpack.c.l.b16 %v375
    %v392 = vunpack.c.l.b16 %v376
    %v393 = vunpack.c.l.b16 %v377
    %v394 = vunpack.c.l.b16 %v378
    %v395 = vunpack.c.l.b16 %v379
    %v396 = vunpack.c.l.b16 %v380
    %v397 = vunpack.c.l.b16 %v381
    %v398 = vpack.c.b16 %v391, %v390
    %v399 = vpack.c.b16 %v393, %v392
    %v400 = vpack.c.b16 %v395, %v394
    %v401 = vpack.c.b16 %v397, %v396
    %vm406 = vcmask 523264
    %v408 = vsel %vm406, %v358, 0
    %v411 = vsel %vm406, %v359, 0
    %v414 = vsel %vm406, %v360, 0
    %v417 = vsel %vm406, %v361, 0
    %v420 = vsel %vm406, %v362, 0
    %v423 = vsel %vm406, %v363, 0
    %v426 = vsel %vm406, %v364, 0
    %v429 = vsel %vm406, %v365, 0
    %v432 = vsel %vm406, %v366, 0
    %v435 = vsel %vm406, %v367, 0
    %v438 = vsel %vm406, %v368, 0
    %v441 = vsel %vm406, %v369, 0
    %v444 = vsel %vm406, %v370, 0
    %v447 = vsel %vm406, %v371, 0
    %v450 = vsel %vm406, %v372, 0
    %v453 = vsel %vm406, %v373, 0
    %455 = vmatprep.subr.bf16.mxu0 0
    %456 = vmatpush1.bf16.msra.mxu0 %v398
    %457 = vmatprep.subr.bf16.mxu0 0
    %458 = vmatpush1.bf16.msra.mxu0 %v399
    %459 = vmatprep.subr.bf16.mxu0 0
    %460 = vmatpush1.bf16.msra.mxu0 %v400
    %461 = vmatprep.subr.bf16.mxu0 0
    %462 = vmatpush1.bf16.msra.mxu0 %v401
    %463 = vmatprep.subr.bf16.mxu0 0
    %464 = vmatpush1.bf16.msra.mxu0 0
    %465 = vmatprep.subr.bf16.mxu0 0
    %466 = vmatpush1.bf16.msra.mxu0 0
    %467 = vmatprep.subr.bf16.mxu0 0
    %468 = vmatpush1.bf16.msra.mxu0 0
    %469 = vmatprep.subr.bf16.mxu0 0
    %470 = vmatpush1.bf16.msra.mxu0 0
    %471 = vmatprep.subr.bf16.mxu0 0
    %472 = vmatpush1.bf16.msra.mxu0 0
    %473 = vmatprep.subr.bf16.mxu0 0
    %474 = vmatpush1.bf16.msra.mxu0 0
    %475 = vmatprep.subr.bf16.mxu0 0
    %476 = vmatpush1.bf16.msra.mxu0 0
    %477 = vmatprep.subr.bf16.mxu0 0
    %478 = vmatpush1.bf16.msra.mxu0 0
    %479 = vmatprep.subr.bf16.mxu0 0
    %480 = vmatpush1.bf16.msra.mxu0 0
    %481 = vmatprep.subr.bf16.mxu0 0
    %482 = vmatpush1.bf16.msra.mxu0 0
    %483 = vmatprep.subr.bf16.mxu0 0
    %484 = vmatpush1.bf16.msra.mxu0 0
    %485 = vmatprep.subr.bf16.mxu0 0
    %486 = vmatpush1.bf16.msra.mxu0 0
    %487 = vmatprep.mubr.bf16.mxu0 0
    %488 = vmatmul.mubr.bf16.gmra.mrb[0].mxu0 %v408
    %v489 = vpop.f32.mrb[0].mxu0
    %v490 = vadd.f32 0.0, %v489
    %v491 = vpop.f32.mrb[0].mxu0
    %v492 = vpop.f32.mrb[0].mxu0
    %v493 = vadd.f32 0.0, %v492
    %v494 = vpop.f32.mrb[0].mxu0
    %495 = vmatprep.mubr.bf16.mxu0 0
    %496 = vmatmul.mubr.bf16.gmra.mrb[0].mxu0 %v411
    %v497 = vpop.f32.mrb[0].mxu0
    %v498 = vadd.f32 0.0, %v497
    %v499 = vpop.f32.mrb[0].mxu0
    %v500 = vpop.f32.mrb[0].mxu0
    %v501 = vadd.f32 0.0, %v500
    %v502 = vpop.f32.mrb[0].mxu0
    %503 = vmatprep.mubr.bf16.mxu0 0
    %504 = vmatmul.mubr.bf16.gmra.mrb[0].mxu0 %v414
    %v505 = vpop.f32.mrb[0].mxu0
    %v506 = vadd.f32 0.0, %v505
    %v507 = vpop.f32.mrb[0].mxu0
    %v508 = vpop.f32.mrb[0].mxu0
    %v509 = vadd.f32 0.0, %v508
    %v510 = vpop.f32.mrb[0].mxu0
    %511 = vmatprep.mubr.bf16.mxu0 0
    %512 = vmatmul.mubr.bf16.gmra.mrb[0].mxu0 %v417
    %v513 = vpop.f32.mrb[0].mxu0
    %v514 = vadd.f32 0.0, %v513
    %v515 = vpop.f32.mrb[0].mxu0
    %v516 = vpop.f32.mrb[0].mxu0
    %v517 = vadd.f32 0.0, %v516
    %v518 = vpop.f32.mrb[0].mxu0
    %519 = vmatprep.mubr.bf16.mxu0 0
    %520 = vmatmul.mubr.bf16.gmra.mrb[0].mxu0 %v420
    %v521 = vpop.f32.mrb[0].mxu0
    %v522 = vadd.f32 0.0, %v521
    %v523 = vpop.f32.mrb[0].mxu0
    %v524 = vpop.f32.mrb[0].mxu0
    %v525 = vadd.f32 0.0, %v524
    %v526 = vpop.f32.mrb[0].mxu0
    %527 = vmatprep.mubr.bf16.mxu0 0
    %528 = vmatmul.mubr.bf16.gmra.mrb[0].mxu0 %v423
    %v529 = vpop.f32.mrb[0].mxu0
    %v530 = vadd.f32 0.0, %v529
    %v531 = vpop.f32.mrb[0].mxu0
    %v532 = vpop.f32.mrb[0].mxu0
    %v533 = vadd.f32 0.0, %v532
    %v534 = vpop.f32.mrb[0].mxu0
    %535 = vmatprep.mubr.bf16.mxu0 0
    %536 = vmatmul.mubr.bf16.gmra.mrb[0].mxu0 %v426
    %v537 = vpop.f32.mrb[0].mxu0
    %v538 = vadd.f32 0.0, %v537
    %v539 = vpop.f32.mrb[0].mxu0
    %v540 = vpop.f32.mrb[0].mxu0
    %v541 = vadd.f32 0.0, %v540
    %v542 = vpop.f32.mrb[0].mxu0
    %543 = vmatprep.mubr.bf16.mxu0 0
    %544 = vmatmul.mubr.bf16.gmra.mrb[0].mxu0 %v429
    %v545 = vpop.f32.mrb[0].mxu0
    %v546 = vadd.f32 0.0, %v545
    %v547 = vpop.f32.mrb[0].mxu0
    %v548 = vpop.f32.mrb[0].mxu0
    %v549 = vadd.f32 0.0, %v548
    %v550 = vpop.f32.mrb[0].mxu0
    %551 = vmatprep.mubr.bf16.mxu0 0
    %552 = vmatmul.mubr.bf16.gmra.mrb[0].mxu0 %v432
    %v553 = vpop.f32.mrb[0].mxu0
    %v554 = vadd.f32 0.0, %v553
    %v555 = vpop.f32.mrb[0].mxu0
    %v556 = vpop.f32.mrb[0].mxu0
    %v557 = vadd.f32 0.0, %v556
    %v558 = vpop.f32.mrb[0].mxu0
    %559 = vmatprep.mubr.bf16.mxu0 0
    %560 = vmatmul.mubr.bf16.gmra.mrb[0].mxu0 %v435
    %v561 = vpop.f32.mrb[0].mxu0
    %v562 = vadd.f32 0.0, %v561
    %v563 = vpop.f32.mrb[0].mxu0
    %v564 = vpop.f32.mrb[0].mxu0
    %v565 = vadd.f32 0.0, %v564
    %v566 = vpop.f32.mrb[0].mxu0
    %567 = vmatprep.mubr.bf16.mxu0 0
    %568 = vmatmul.mubr.bf16.gmra.mrb[0].mxu0 %v438
    %v569 = vpop.f32.mrb[0].mxu0
    %v570 = vadd.f32 0.0, %v569
    %v571 = vpop.f32.mrb[0].mxu0
    %v572 = vpop.f32.mrb[0].mxu0
    %v573 = vadd.f32 0.0, %v572
    %v574 = vpop.f32.mrb[0].mxu0
    %575 = vmatprep.mubr.bf16.mxu0 0
    %576 = vmatmul.mubr.bf16.gmra.mrb[0].mxu0 %v441
    %v577 = vpop.f32.mrb[0].mxu0
    %v578 = vadd.f32 0.0, %v577
    %v579 = vpop.f32.mrb[0].mxu0
    %v580 = vpop.f32.mrb[0].mxu0
    %v581 = vadd.f32 0.0, %v580
    %v582 = vpop.f32.mrb[0].mxu0
    %583 = vmatprep.mubr.bf16.mxu0 0
    %584 = vmatmul.mubr.bf16.gmra.mrb[0].mxu0 %v444
    %v585 = vpop.f32.mrb[0].mxu0
    %v586 = vadd.f32 0.0, %v585
    %v587 = vpop.f32.mrb[0].mxu0
    %v588 = vpop.f32.mrb[0].mxu0
    %v589 = vadd.f32 0.0, %v588
    %v590 = vpop.f32.mrb[0].mxu0
    %591 = vmatprep.mubr.bf16.mxu0 0
    %592 = vmatmul.mubr.bf16.gmra.mrb[0].mxu0 %v447
    %v593 = vpop.f32.mrb[0].mxu0
    %v594 = vadd.f32 0.0, %v593
    %v595 = vpop.f32.mrb[0].mxu0
    %v596 = vpop.f32.mrb[0].mxu0
    %v597 = vadd.f32 0.0, %v596
    %v598 = vpop.f32.mrb[0].mxu0
    %599 = vmatprep.mubr.bf16.mxu0 0
    %600 = vmatmul.mubr.bf16.gmra.mrb[0].mxu0 %v450
    %v601 = vpop.f32.mrb[0].mxu0
    %v602 = vadd.f32 0.0, %v601
    %v603 = vpop.f32.mrb[0].mxu0
    %v604 = vpop.f32.mrb[0].mxu0
    %v605 = vadd.f32 0.0, %v604
    %v606 = vpop.f32.mrb[0].mxu0
    %607 = vmatprep.mubr.bf16.mxu0 0
    %608 = vmatmul.mubr.bf16.gmra.mrb[0].mxu0 %v453
    %v609 = vpop.f32.mrb[0].mxu0
    %v610 = vadd.f32 0.0, %v609
    %v611 = vpop.f32.mrb[0].mxu0
    %v612 = vpop.f32.mrb[0].mxu0
    %v613 = vadd.f32 0.0, %v612
    %v614 = vpop.f32.mrb[0].mxu0
    %615 = vdwg.mxu0
    %v616 = vld [vmem:[%s5 + $0x1] ss:$0 sm:$0xff]
    %v617 = vpack.c.bf16 %v493, %v490
    %v618 = vpack.c.bf16 %v501, %v498
    %v619 = vpack.c.bf16 %v509, %v506
    %v620 = vpack.c.bf16 %v517, %v514
    %v621 = vpack.c.bf16 %v525, %v522
    %v622 = vpack.c.bf16 %v533, %v530
    %v623 = vpack.c.bf16 %v541, %v538
    %v624 = vpack.c.bf16 %v549, %v546
    %v625 = vpack.c.bf16 %v557, %v554
    %v626 = vpack.c.bf16 %v565, %v562
    %v627 = vpack.c.bf16 %v573, %v570
    %v628 = vpack.c.bf16 %v581, %v578
    %v629 = vpack.c.bf16 %v589, %v586
    %v630 = vpack.c.bf16 %v597, %v594
    %v631 = vpack.c.bf16 %v605, %v602
    %v632 = vpack.c.bf16 %v613, %v610
    %v633 = vpack.c.bf16 %v616, %v616
    %v634 = vadd.bf16 %v617, %v633
    %v635 = vadd.bf16 %v618, %v633
    %v636 = vadd.bf16 %v619, %v633
    %v637 = vadd.bf16 %v620, %v633
    %v638 = vadd.bf16 %v621, %v633
    %v639 = vadd.bf16 %v622, %v633
    %v640 = vadd.bf16 %v623, %v633
    %v641 = vadd.bf16 %v624, %v633
    %v642 = vadd.bf16 %v625, %v633
    %v643 = vadd.bf16 %v626, %v633
    %v644 = vadd.bf16 %v627, %v633
    %v645 = vadd.bf16 %v628, %v633
    %v646 = vadd.bf16 %v629, %v633
    %v647 = vadd.bf16 %v630, %v633
    %v648 = vadd.bf16 %v631, %v633
    %v649 = vadd.bf16 %v632, %v633
    %v650 = vmax.bf16 %v634, 0
    %v651 = vmax.bf16 %v635, 0
    %v652 = vmax.bf16 %v636, 0
    %v653 = vmax.bf16 %v637, 0
    %v654 = vmax.bf16 %v638, 0
    %v655 = vmax.bf16 %v639, 0
    %v656 = vmax.bf16 %v640, 0
    %v657 = vmax.bf16 %v641, 0
    %v658 = vmax.bf16 %v642, 0
    %v659 = vmax.bf16 %v643, 0
    %v660 = vmax.bf16 %v644, 0
    %v661 = vmax.bf16 %v645, 0
    %v662 = vmax.bf16 %v646, 0
    %v663 = vmax.bf16 %v647, 0
    %v664 = vmax.bf16 %v648, 0
    %v665 = vmax.bf16 %v649, 0
    %v666 = vld [vmem:[#allocation6] sm:$0xff]
    %v667 = vld [vmem:[#allocation6 + $0x8] sm:$0xff]
    %v668 = vld [vmem:[#allocation6 + $0x10] sm:$0xff]
    %v669 = vld [vmem:[#allocation6 + $0x18] sm:$0xff]
    %v670 = vld [vmem:[#allocation6 + $0x20] sm:$0xff]
    %v671 = vld [vmem:[#allocation6 + $0x28] sm:$0xff]
    %v672 = vld [vmem:[#allocation6 + $0x30] sm:$0xff]
    %v673 = vld [vmem:[#allocation6 + $0x38] sm:$0xff]
    %v674 = vld [vmem:[#allocation6 + $0x40] sm:$0xff]
    %v675 = vld [vmem:[#allocation6 + $0x48] sm:$0xff]
    %v676 = vld [vmem:[#allocation6 + $0x50] sm:$0xff]
    %v677 = vld [vmem:[#allocation6 + $0x58] sm:$0xff]
    %v678 = vld [vmem:[#allocation6 + $0x60] sm:$0xff]
    %v679 = vld [vmem:[#allocation6 + $0x68] sm:$0xff]
    %v680 = vld [vmem:[#allocation6 + $0x70] sm:$0xff]
    %v681 = vld [vmem:[#allocation6 + $0x78] sm:$0xff]
    %s682 = scalar_lea.vmem %s5, 2
    %v683 = vld [vmem:[%s682] ss:$8 sm:$0x3]
    %v685 = vlaneseq
    %v686 = vshrl.u32 %v685, 7
    %v687 = vsub.s32 0, %v686
    %v688 = vrot.slane %v683, %v687
    %v689 = vlaneseq
    %v690 = vshrl.u32 %v689, 7
    %v691 = vsub.s32 1, %v690
    %v692 = vrot.slane %v683, %v691
    %v711 = vunpack.c.l.b16 %v666
    %v712 = vunpack.c.h.b16 %v666
    %v713 = vunpack.c.l.b16 %v667
    %v714 = vunpack.c.h.b16 %v667
    %v715 = vunpack.c.l.b16 %v668
    %v716 = vunpack.c.h.b16 %v668
    %v717 = vunpack.c.l.b16 %v669
    %v718 = vunpack.c.h.b16 %v669
    %v719 = vunpack.c.l.b16 %v670
    %v720 = vunpack.c.h.b16 %v670
    %v721 = vunpack.c.l.b16 %v671
    %v722 = vunpack.c.h.b16 %v671
    %v723 = vunpack.c.l.b16 %v672
    %v724 = vunpack.c.h.b16 %v672
    %v725 = vunpack.c.l.b16 %v673
    %v726 = vunpack.c.h.b16 %v673
    %v727 = vunpack.c.l.b16 %v674
    %v728 = vunpack.c.h.b16 %v674
    %v729 = vunpack.c.l.b16 %v675
    %v730 = vunpack.c.h.b16 %v675
    %v731 = vunpack.c.l.b16 %v676
    %v732 = vunpack.c.h.b16 %v676
    %v733 = vunpack.c.l.b16 %v677
    %v734 = vunpack.c.h.b16 %v677
    %v735 = vunpack.c.l.b16 %v678
    %v736 = vunpack.c.h.b16 %v678
    %v737 = vunpack.c.l.b16 %v679
    %v738 = vunpack.c.h.b16 %v679
    %v739 = vunpack.c.l.b16 %v680
    %v740 = vunpack.c.h.b16 %v680
    %v741 = vunpack.c.l.b16 %v681
    %v742 = vunpack.c.h.b16 %v681
    %v743 = vpack.c.b16 %v713, %v711
    %v744 = vpack.c.b16 %v714, %v712
    %v745 = vpack.c.b16 %v717, %v715
    %v746 = vpack.c.b16 %v718, %v716
    %v747 = vpack.c.b16 %v721, %v719
    %v748 = vpack.c.b16 %v722, %v720
    %v749 = vpack.c.b16 %v725, %v723
    %v750 = vpack.c.b16 %v726, %v724
    %v751 = vpack.c.b16 %v729, %v727
    %v752 = vpack.c.b16 %v730, %v728
    %v753 = vpack.c.b16 %v733, %v731
    %v754 = vpack.c.b16 %v734, %v732
    %v755 = vpack.c.b16 %v737, %v735
    %v756 = vpack.c.b16 %v738, %v736
    %v757 = vpack.c.b16 %v741, %v739
    %v758 = vpack.c.b16 %v742, %v740
    %775 = vmatprep.subr.bf16.mxu0 %v744
    %776 = vmatpush1.bf16.msra.mxu0 %v743
    %777 = vmatprep.subr.bf16.mxu0 %v746
    %778 = vmatpush1.bf16.msra.mxu0 %v745
    %779 = vmatprep.subr.bf16.mxu0 %v748
    %780 = vmatpush1.bf16.msra.mxu0 %v747
    %781 = vmatprep.subr.bf16.mxu0 %v750
    %782 = vmatpush1.bf16.msra.mxu0 %v749
    %783 = vmatprep.subr.bf16.mxu0 %v752
    %784 = vmatpush1.bf16.msra.mxu0 %v751
    %785 = vmatprep.subr.bf16.mxu0 %v754
    %786 = vmatpush1.bf16.msra.mxu0 %v753
    %787 = vmatprep.subr.bf16.mxu0 %v756
    %788 = vmatpush1.bf16.msra.mxu0 %v755
    %789 = vmatprep.subr.bf16.mxu0 %v758
    %790 = vmatpush1.bf16.msra.mxu0 %v757
    %791 = vmatprep.subr.bf16.mxu0 0
    %792 = vmatpush1.bf16.msra.mxu0 0
    %793 = vmatprep.subr.bf16.mxu0 0
    %794 = vmatpush1.bf16.msra.mxu0 0
    %795 = vmatprep.subr.bf16.mxu0 0
    %796 = vmatpush1.bf16.msra.mxu0 0
    %797 = vmatprep.subr.bf16.mxu0 0
    %798 = vmatpush1.bf16.msra.mxu0 0
    %799 = vmatprep.subr.bf16.mxu0 0
    %800 = vmatpush1.bf16.msra.mxu0 0
    %801 = vmatprep.subr.bf16.mxu0 0
    %802 = vmatpush1.bf16.msra.mxu0 0
    %803 = vmatprep.subr.bf16.mxu0 0
    %804 = vmatpush1.bf16.msra.mxu0 0
    %805 = vmatprep.subr.bf16.mxu0 0
    %806 = vmatpush1.bf16.msra.mxu0 0
    %807 = vmatprep.mubr.bf16.mxu0 0
    %808 = vmatmul.mubr.bf16.gmra.mrb[0].mxu0 %v650
    %v809 = vpop.f32.mrb[0].mxu0
    %v810 = vadd.f32 %v688, %v809
    %v811 = vpop.f32.mrb[0].mxu0
    %v812 = vadd.f32 %v692, %v811
    %v813 = vpop.f32.mrb[0].mxu0
    %v814 = vadd.f32 %v688, %v813
    %v815 = vpop.f32.mrb[0].mxu0
    %v816 = vadd.f32 %v692, %v815
    %817 = vmatprep.mubr.bf16.mxu0 0
    %818 = vmatmul.mubr.bf16.gmra.mrb[0].mxu0 %v651
    %v819 = vpop.f32.mrb[0].mxu0
    %v820 = vadd.f32 %v688, %v819
    %v821 = vpop.f32.mrb[0].mxu0
    %v822 = vadd.f32 %v692, %v821
    %v823 = vpop.f32.mrb[0].mxu0
    %v824 = vadd.f32 %v688, %v823
    %v825 = vpop.f32.mrb[0].mxu0
    %v826 = vadd.f32 %v692, %v825
    %827 = vmatprep.mubr.bf16.mxu0 0
    %828 = vmatmul.mubr.bf16.gmra.mrb[0].mxu0 %v652
    %v829 = vpop.f32.mrb[0].mxu0
    %v830 = vadd.f32 %v688, %v829
    %v831 = vpop.f32.mrb[0].mxu0
    %v832 = vadd.f32 %v692, %v831
    %v833 = vpop.f32.mrb[0].mxu0
    %v834 = vadd.f32 %v688, %v833
    %v835 = vpop.f32.mrb[0].mxu0
    %v836 = vadd.f32 %v692, %v835
    %837 = vmatprep.mubr.bf16.mxu0 0
    %838 = vmatmul.mubr.bf16.gmra.mrb[0].mxu0 %v653
    %v839 = vpop.f32.mrb[0].mxu0
    %v840 = vadd.f32 %v688, %v839
    %v841 = vpop.f32.mrb[0].mxu0
    %v842 = vadd.f32 %v692, %v841
    %v843 = vpop.f32.mrb[0].mxu0
    %v844 = vadd.f32 %v688, %v843
    %v845 = vpop.f32.mrb[0].mxu0
    %v846 = vadd.f32 %v692, %v845
    %847 = vmatprep.mubr.bf16.mxu0 0
    %848 = vmatmul.mubr.bf16.gmra.mrb[0].mxu0 %v654
    %v849 = vpop.f32.mrb[0].mxu0
    %v850 = vadd.f32 %v688, %v849
    %v851 = vpop.f32.mrb[0].mxu0
    %v852 = vadd.f32 %v692, %v851
    %v853 = vpop.f32.mrb[0].mxu0
    %v854 = vadd.f32 %v688, %v853
    %v855 = vpop.f32.mrb[0].mxu0
    %v856 = vadd.f32 %v692, %v855
    %857 = vmatprep.mubr.bf16.mxu0 0
    %858 = vmatmul.mubr.bf16.gmra.mrb[0].mxu0 %v655
    %v859 = vpop.f32.mrb[0].mxu0
    %v860 = vadd.f32 %v688, %v859
    %v861 = vpop.f32.mrb[0].mxu0
    %v862 = vadd.f32 %v692, %v861
    %v863 = vpop.f32.mrb[0].mxu0
    %v864 = vadd.f32 %v688, %v863
    %v865 = vpop.f32.mrb[0].mxu0
    %v866 = vadd.f32 %v692, %v865
    %867 = vmatprep.mubr.bf16.mxu0 0
    %868 = vmatmul.mubr.bf16.gmra.mrb[0].mxu0 %v656
    %v869 = vpop.f32.mrb[0].mxu0
    %v870 = vadd.f32 %v688, %v869
    %v871 = vpop.f32.mrb[0].mxu0
    %v872 = vadd.f32 %v692, %v871
    %v873 = vpop.f32.mrb[0].mxu0
    %v874 = vadd.f32 %v688, %v873
    %v875 = vpop.f32.mrb[0].mxu0
    %v876 = vadd.f32 %v692, %v875
    %877 = vmatprep.mubr.bf16.mxu0 0
    %878 = vmatmul.mubr.bf16.gmra.mrb[0].mxu0 %v657
    %v879 = vpop.f32.mrb[0].mxu0
    %v880 = vadd.f32 %v688, %v879
    %v881 = vpop.f32.mrb[0].mxu0
    %v882 = vadd.f32 %v692, %v881
    %v883 = vpop.f32.mrb[0].mxu0
    %v884 = vadd.f32 %v688, %v883
    %v885 = vpop.f32.mrb[0].mxu0
    %v886 = vadd.f32 %v692, %v885
    %887 = vmatprep.mubr.bf16.mxu0 0
    %888 = vmatmul.mubr.bf16.gmra.mrb[0].mxu0 %v658
    %v889 = vpop.f32.mrb[0].mxu0
    %v890 = vadd.f32 %v688, %v889
    %v891 = vpop.f32.mrb[0].mxu0
    %v892 = vadd.f32 %v692, %v891
    %v893 = vpop.f32.mrb[0].mxu0
    %v894 = vadd.f32 %v688, %v893
    %v895 = vpop.f32.mrb[0].mxu0
    %v896 = vadd.f32 %v692, %v895
    %897 = vmatprep.mubr.bf16.mxu0 0
    %898 = vmatmul.mubr.bf16.gmra.mrb[0].mxu0 %v659
    %v899 = vpop.f32.mrb[0].mxu0
    %v900 = vadd.f32 %v688, %v899
    %v901 = vpop.f32.mrb[0].mxu0
    %v902 = vadd.f32 %v692, %v901
    %v903 = vpop.f32.mrb[0].mxu0
    %v904 = vadd.f32 %v688, %v903
    %v905 = vpop.f32.mrb[0].mxu0
    %v906 = vadd.f32 %v692, %v905
    %907 = vmatprep.mubr.bf16.mxu0 0
    %908 = vmatmul.mubr.bf16.gmra.mrb[0].mxu0 %v660
    %v909 = vpop.f32.mrb[0].mxu0
    %v910 = vadd.f32 %v688, %v909
    %v911 = vpop.f32.mrb[0].mxu0
    %v912 = vadd.f32 %v692, %v911
    %v913 = vpop.f32.mrb[0].mxu0
    %v914 = vadd.f32 %v688, %v913
    %v915 = vpop.f32.mrb[0].mxu0
    %v916 = vadd.f32 %v692, %v915
    %917 = vmatprep.mubr.bf16.mxu0 0
    %918 = vmatmul.mubr.bf16.gmra.mrb[0].mxu0 %v661
    %v919 = vpop.f32.mrb[0].mxu0
    %v920 = vadd.f32 %v688, %v919
    %v921 = vpop.f32.mrb[0].mxu0
    %v922 = vadd.f32 %v692, %v921
    %v923 = vpop.f32.mrb[0].mxu0
    %v924 = vadd.f32 %v688, %v923
    %v925 = vpop.f32.mrb[0].mxu0
    %v926 = vadd.f32 %v692, %v925
    %927 = vmatprep.mubr.bf16.mxu0 0
    %928 = vmatmul.mubr.bf16.gmra.mrb[0].mxu0 %v662
    %v929 = vpop.f32.mrb[0].mxu0
    %v930 = vadd.f32 %v688, %v929
    %v931 = vpop.f32.mrb[0].mxu0
    %v932 = vadd.f32 %v692, %v931
    %v933 = vpop.f32.mrb[0].mxu0
    %v934 = vadd.f32 %v688, %v933
    %v935 = vpop.f32.mrb[0].mxu0
    %v936 = vadd.f32 %v692, %v935
    %937 = vmatprep.mubr.bf16.mxu0 0
    %938 = vmatmul.mubr.bf16.gmra.mrb[0].mxu0 %v663
    %v939 = vpop.f32.mrb[0].mxu0
    %v940 = vadd.f32 %v688, %v939
    %v941 = vpop.f32.mrb[0].mxu0
    %v942 = vadd.f32 %v692, %v941
    %v943 = vpop.f32.mrb[0].mxu0
    %v944 = vadd.f32 %v688, %v943
    %v945 = vpop.f32.mrb[0].mxu0
    %v946 = vadd.f32 %v692, %v945
    %947 = vmatprep.mubr.bf16.mxu0 0
    %948 = vmatmul.mubr.bf16.gmra.mrb[0].mxu0 %v664
    %v949 = vpop.f32.mrb[0].mxu0
    %v950 = vadd.f32 %v688, %v949
    %v951 = vpop.f32.mrb[0].mxu0
    %v952 = vadd.f32 %v692, %v951
    %v953 = vpop.f32.mrb[0].mxu0
    %v954 = vadd.f32 %v688, %v953
    %v955 = vpop.f32.mrb[0].mxu0
    %v956 = vadd.f32 %v692, %v955
    %957 = vmatprep.mubr.bf16.mxu0 0
    %958 = vmatmul.mubr.bf16.gmra.mrb[0].mxu0 %v665
    %v959 = vpop.f32.mrb[0].mxu0
    %v960 = vadd.f32 %v688, %v959
    %v961 = vpop.f32.mrb[0].mxu0
    %v962 = vadd.f32 %v692, %v961
    %v963 = vpop.f32.mrb[0].mxu0
    %v964 = vadd.f32 %v688, %v963
    %v965 = vpop.f32.mrb[0].mxu0
    %v966 = vadd.f32 %v692, %v965
    %967 = vdwg.mxu0
    %v968 = vmax.f32 %v810, %v814
    %v969 = vmax.f32 %v968, %v820
    %v970 = vmax.f32 %v969, %v824
    %v971 = vmax.f32 %v970, %v830
    %v972 = vmax.f32 %v971, %v834
    %v973 = vmax.f32 %v972, %v840
    %v974 = vmax.f32 %v973, %v844
    %v975 = vmax.f32 %v974, %v850
    %v976 = vmax.f32 %v975, %v854
    %v977 = vmax.f32 %v976, %v860
    %v978 = vmax.f32 %v977, %v864
    %v979 = vmax.f32 %v978, %v870
    %v980 = vmax.f32 %v979, %v874
    %v981 = vmax.f32 %v980, %v880
    %v982 = vmax.f32 %v981, %v884
    %v983 = vrot.slane %v982, 4
    %v984 = vmax.f32 %v982, %v983
    %v985 = vrot.slane %v984, 2
    %v986 = vmax.f32 %v984, %v985
    %v987 = vrot.slane %v986, 1
    %v988 = vmax.f32 %v986, %v987
    %v989 = vmax.f32 %v812, %v816
    %v990 = vmax.f32 %v989, %v822
    %v991 = vmax.f32 %v990, %v826
    %v992 = vmax.f32 %v991, %v832
    %v993 = vmax.f32 %v992, %v836
    %v994 = vmax.f32 %v993, %v842
    %v995 = vmax.f32 %v994, %v846
    %v996 = vmax.f32 %v995, %v852
    %v997 = vmax.f32 %v996, %v856
    %v998 = vmax.f32 %v997, %v862
    %v999 = vmax.f32 %v998, %v866
    %v1000 = vmax.f32 %v999, %v872
    %v1001 = vmax.f32 %v1000, %v876
    %v1002 = vmax.f32 %v1001, %v882
    %v1003 = vmax.f32 %v1002, %v886
    %v1004 = vrot.slane %v1003, 4
    %v1005 = vmax.f32 %v1003, %v1004
    %v1006 = vrot.slane %v1005, 2
    %v1007 = vmax.f32 %v1005, %v1006
    %v1008 = vrot.slane %v1007, 1
    %v1009 = vmax.f32 %v1007, %v1008
    %v1010 = vmax.f32 %v890, %v894
    %v1011 = vmax.f32 %v1010, %v900
    %v1012 = vmax.f32 %v1011, %v904
    %v1013 = vmax.f32 %v1012, %v910
    %v1014 = vmax.f32 %v1013, %v914
    %v1015 = vmax.f32 %v1014, %v920
    %v1016 = vmax.f32 %v1015, %v924
    %v1017 = vmax.f32 %v1016, %v930
    %v1018 = vmax.f32 %v1017, %v934
    %v1019 = vmax.f32 %v1018, %v940
    %v1020 = vmax.f32 %v1019, %v944
    %v1021 = vmax.f32 %v1020, %v950
    %v1022 = vmax.f32 %v1021, %v954
    %v1023 = vmax.f32 %v1022, %v960
    %v1024 = vmax.f32 %v1023, %v964
    %v1025 = vrot.slane %v1024, 4
    %v1026 = vmax.f32 %v1024, %v1025
    %v1027 = vrot.slane %v1026, 2
    %v1028 = vmax.f32 %v1026, %v1027
    %v1029 = vrot.slane %v1028, 1
    %v1030 = vmax.f32 %v1028, %v1029
    %v1031 = vmax.f32 %v892, %v896
    %v1032 = vmax.f32 %v1031, %v902
    %v1033 = vmax.f32 %v1032, %v906
    %v1034 = vmax.f32 %v1033, %v912
    %v1035 = vmax.f32 %v1034, %v916
    %v1036 = vmax.f32 %v1035, %v922
    %v1037 = vmax.f32 %v1036, %v926
    %v1038 = vmax.f32 %v1037, %v932
    %v1039 = vmax.f32 %v1038, %v936
    %v1040 = vmax.f32 %v1039, %v942
    %v1041 = vmax.f32 %v1040, %v946
    %v1042 = vmax.f32 %v1041, %v952
    %v1043 = vmax.f32 %v1042, %v956
    %v1044 = vmax.f32 %v1043, %v962
    %v1045 = vmax.f32 %v1044, %v966
    %v1046 = vrot.slane %v1045, 4
    %v1047 = vmax.f32 %v1045, %v1046
    %v1048 = vrot.slane %v1047, 2
    %v1049 = vmax.f32 %v1047, %v1048
    %v1050 = vrot.slane %v1049, 1
    %v1051 = vmax.f32 %v1049, %v1050
    %v1052 = vld [vmem:[#allocation2] sm:$0xf]
    %v1057 = vcombine.low %v988, %v1009
    %v1059 = vunpack.c.l.s4 1983009808
    %v1060 = vunpack.c.0.s8 %v1059
    %v1061 = vlaneseq
    %v1062 = vshrl.u32 %v1061, 7
    %v1063 = vsub.s32 %v1060, %v1062
    %v1064 = vrot.slane %v1057, %v1063
    %v1065 = vcombine.low %v1030, %v1051
    %v1067 = vunpack.c.l.s4 1983009808
    %v1068 = vunpack.c.0.s8 %v1067
    %v1069 = vlaneseq
    %v1070 = vshrl.u32 %v1069, 7
    %v1071 = vsub.s32 %v1068, %v1070
    %v1072 = vrot.slane %v1065, %v1071
    %vm1073 = vcmask 1044484
    %v1074 = vsel %vm1073, %v1064, %v1064
    %vm1075 = vcmask 1046534
    %v1076 = vsel %vm1075, %v1064, %v1074
    %v1077 = vrot.slane %v1072, 7
    %vm1078 = vcmask 1041409
    %v1079 = vsel %vm1078, %v1077, %v1076
    %vm1080 = vcmask 1043459
    %v1081 = vsel %vm1080, %v1077, %v1079
    %vm1082 = vcmask 1045509
    %v1083 = vsel %vm1082, %v1077, %v1081
    %vm1084 = vcmask 1047559
    %v1085 = vsel %vm1084, %v1077, %v1083
    %v1087 = vmax.f32 %v1052, %v1085
    %1088 = vst [vmem:[#allocation2] sm:$0xf] %v1087
    // Predicated region
    $region38: #{tpu_custom_call.1} parent=1 // pred_check
      %p1089 = pneg %p53
    $region39: #{tpu_custom_call.1} parent=1 // pred_check_branch
      %1091 = sbr.rel (%p1089) target = $region41
    $region40: #{tpu_custom_call.1} parent=1 // pred_region
      %v1092 = vld [vmem:[#allocation2] sm:$0xf]
      %v1095 = vunpack.c.l.s4 1983009808
      %v1096 = vunpack.c.0.s8 %v1095
      %v1097 = vlaneseq
      %v1098 = vshrl.u32 %v1097, 7
      %v1099 = vsub.s32 %v1096, %v1098
      %v1100 = vrot.slane %v1092, %v1099
      %v1101 = vcombine.high %v1100, %v1100
      %v1104 = vpack.c.bf16 %v1100, %v1100
      %v1105 = vpack.c.bf16 %v1101, %v1101
      %v1106 = vld [vmem:[%s4] sm:$0xff]
      %v1107 = vld [vmem:[%s4 + $0x8] sm:$0xff]
      %v1108 = vld [vmem:[%s4 + $0x10] sm:$0xff]
      %v1109 = vld [vmem:[%s4 + $0x18] sm:$0xff]
      %v1110 = vld [vmem:[%s4 + $0x20] sm:$0xff]
      %v1111 = vld [vmem:[%s4 + $0x28] sm:$0xff]
      %v1112 = vld [vmem:[%s4 + $0x30] sm:$0xff]
      %v1113 = vld [vmem:[%s4 + $0x38] sm:$0xff]
      %v1114 = vld [vmem:[%s4 + $0x40] sm:$0xff]
      %v1115 = vld [vmem:[%s4 + $0x48] sm:$0xff]
      %v1116 = vld [vmem:[%s4 + $0x50] sm:$0xff]
      %v1117 = vld [vmem:[%s4 + $0x58] sm:$0xff]
      %v1118 = vld [vmem:[%s4 + $0x60] sm:$0xff]
      %v1119 = vld [vmem:[%s4 + $0x68] sm:$0xff]
      %v1120 = vld [vmem:[%s4 + $0x70] sm:$0xff]
      %v1121 = vld [vmem:[%s4 + $0x78] sm:$0xff]
      %v1122 = vld [vmem:[%s4 + $0x80] sm:$0xff]
      %v1123 = vld [vmem:[%s4 + $0x88] sm:$0xff]
      %v1124 = vld [vmem:[%s4 + $0x90] sm:$0xff]
      %v1125 = vld [vmem:[%s4 + $0x98] sm:$0xff]
      %v1126 = vld [vmem:[%s4 + $0xa0] sm:$0xff]
      %v1127 = vld [vmem:[%s4 + $0xa8] sm:$0xff]
      %v1128 = vld [vmem:[%s4 + $0xb0] sm:$0xff]
      %v1129 = vld [vmem:[%s4 + $0xb8] sm:$0xff]
      %v1130 = vld [vmem:[%s4 + $0xc0] sm:$0xff]
      %v1131 = vld [vmem:[%s4 + $0xc8] sm:$0xff]
      %v1132 = vld [vmem:[%s4 + $0xd0] sm:$0xff]
      %v1133 = vld [vmem:[%s4 + $0xd8] sm:$0xff]
      %v1134 = vld [vmem:[%s4 + $0xe0] sm:$0xff]
      %v1135 = vld [vmem:[%s4 + $0xe8] sm:$0xff]
      %v1136 = vld [vmem:[%s4 + $0xf0] sm:$0xff]
      %v1137 = vld [vmem:[%s4 + $0xf8] sm:$0xff]
      %s1138 = scalar_lea.vmem %s5, 3
      %v1139 = vld [vmem:[%s1138] ss:$8 sm:$0x3]
      %v1141 = vlaneseq
      %v1142 = vshrl.u32 %v1141, 7
      %v1143 = vsub.s32 0, %v1142
      %v1144 = vrot.slane %v1139, %v1143
      %v1145 = vlaneseq
      %v1146 = vshrl.u32 %v1145, 7
      %v1147 = vsub.s32 1, %v1146
      %v1148 = vrot.slane %v1139, %v1147
      %v1183 = vunpack.c.l.b16 %v1106
      %v1184 = vunpack.c.h.b16 %v1106
      %v1185 = vunpack.c.l.b16 %v1107
      %v1186 = vunpack.c.h.b16 %v1107
      %v1187 = vunpack.c.l.b16 %v1108
      %v1188 = vunpack.c.h.b16 %v1108
      %v1189 = vunpack.c.l.b16 %v1109
      %v1190 = vunpack.c.h.b16 %v1109
      %v1191 = vunpack.c.l.b16 %v1110
      %v1192 = vunpack.c.h.b16 %v1110
      %v1193 = vunpack.c.l.b16 %v1111
      %v1194 = vunpack.c.h.b16 %v1111
      %v1195 = vunpack.c.l.b16 %v1112
      %v1196 = vunpack.c.h.b16 %v1112
      %v1197 = vunpack.c.l.b16 %v1113
      %v1198 = vunpack.c.h.b16 %v1113
      %v1199 = vunpack.c.l.b16 %v1114
      %v1200 = vunpack.c.h.b16 %v1114
      %v1201 = vunpack.c.l.b16 %v1115
      %v1202 = vunpack.c.h.b16 %v1115
      %v1203 = vunpack.c.l.b16 %v1116
      %v1204 = vunpack.c.h.b16 %v1116
      %v1205 = vunpack.c.l.b16 %v1117
      %v1206 = vunpack.c.h.b16 %v1117
      %v1207 = vunpack.c.l.b16 %v1118
      %v1208 = vunpack.c.h.b16 %v1118
      %v1209 = vunpack.c.l.b16 %v1119
      %v1210 = vunpack.c.h.b16 %v1119
      %v1211 = vunpack.c.l.b16 %v1120
      %v1212 = vunpack.c.h.b16 %v1120
      %v1213 = vunpack.c.l.b16 %v1121
      %v1214 = vunpack.c.h.b16 %v1121
      %v1215 = vunpack.c.l.b16 %v1122
      %v1216 = vunpack.c.h.b16 %v1122
      %v1217 = vunpack.c.l.b16 %v1123
      %v1218 = vunpack.c.h.b16 %v1123
      %v1219 = vunpack.c.l.b16 %v1124
      %v1220 = vunpack.c.h.b16 %v1124
      %v1221 = vunpack.c.l.b16 %v1125
      %v1222 = vunpack.c.h.b16 %v1125
      %v1223 = vunpack.c.l.b16 %v1126
      %v1224 = vunpack.c.h.b16 %v1126
      %v1225 = vunpack.c.l.b16 %v1127
      %v1226 = vunpack.c.h.b16 %v1127
      %v1227 = vunpack.c.l.b16 %v1128
      %v1228 = vunpack.c.h.b16 %v1128
      %v1229 = vunpack.c.l.b16 %v1129
      %v1230 = vunpack.c.h.b16 %v1129
      %v1231 = vunpack.c.l.b16 %v1130
      %v1232 = vunpack.c.h.b16 %v1130
      %v1233 = vunpack.c.l.b16 %v1131
      %v1234 = vunpack.c.h.b16 %v1131
      %v1235 = vunpack.c.l.b16 %v1132
      %v1236 = vunpack.c.h.b16 %v1132
      %v1237 = vunpack.c.l.b16 %v1133
      %v1238 = vunpack.c.h.b16 %v1133
      %v1239 = vunpack.c.l.b16 %v1134
      %v1240 = vunpack.c.h.b16 %v1134
      %v1241 = vunpack.c.l.b16 %v1135
      %v1242 = vunpack.c.h.b16 %v1135
      %v1243 = vunpack.c.l.b16 %v1136
      %v1244 = vunpack.c.h.b16 %v1136
      %v1245 = vunpack.c.l.b16 %v1137
      %v1246 = vunpack.c.h.b16 %v1137
      %v1247 = vpack.c.b16 %v1185, %v1183
      %v1248 = vpack.c.b16 %v1186, %v1184
      %v1249 = vpack.c.b16 %v1189, %v1187
      %v1250 = vpack.c.b16 %v1190, %v1188
      %v1251 = vpack.c.b16 %v1193, %v1191
      %v1252 = vpack.c.b16 %v1194, %v1192
      %v1253 = vpack.c.b16 %v1197, %v1195
      %v1254 = vpack.c.b16 %v1198, %v1196
      %v1255 = vpack.c.b16 %v1201, %v1199
      %v1256 = vpack.c.b16 %v1202, %v1200
      %v1257 = vpack.c.b16 %v1205, %v1203
      %v1258 = vpack.c.b16 %v1206, %v1204
      %v1259 = vpack.c.b16 %v1209, %v1207
      %v1260 = vpack.c.b16 %v1210, %v1208
      %v1261 = vpack.c.b16 %v1213, %v1211
      %v1262 = vpack.c.b16 %v1214, %v1212
      %v1263 = vpack.c.b16 %v1217, %v1215
      %v1264 = vpack.c.b16 %v1218, %v1216
      %v1265 = vpack.c.b16 %v1221, %v1219
      %v1266 = vpack.c.b16 %v1222, %v1220
      %v1267 = vpack.c.b16 %v1225, %v1223
      %v1268 = vpack.c.b16 %v1226, %v1224
      %v1269 = vpack.c.b16 %v1229, %v1227
      %v1270 = vpack.c.b16 %v1230, %v1228
      %v1271 = vpack.c.b16 %v1233, %v1231
      %v1272 = vpack.c.b16 %v1234, %v1232
      %v1273 = vpack.c.b16 %v1237, %v1235
      %v1274 = vpack.c.b16 %v1238, %v1236
      %v1275 = vpack.c.b16 %v1241, %v1239
      %v1276 = vpack.c.b16 %v1242, %v1240
      %v1277 = vpack.c.b16 %v1245, %v1243
      %v1278 = vpack.c.b16 %v1246, %v1244
      %1311 = vmatprep.subr.bf16.mxu0 %v1248
      %1312 = vmatpush1.bf16.msra.mxu0 %v1247
      %1313 = vmatprep.subr.bf16.mxu0 %v1250
      %1314 = vmatpush1.bf16.msra.mxu0 %v1249
      %1315 = vmatprep.subr.bf16.mxu0 %v1252
      %1316 = vmatpush1.bf16.msra.mxu0 %v1251
      %1317 = vmatprep.subr.bf16.mxu0 %v1254
      %1318 = vmatpush1.bf16.msra.mxu0 %v1253
      %1319 = vmatprep.subr.bf16.mxu0 %v1256
      %1320 = vmatpush1.bf16.msra.mxu0 %v1255
      %1321 = vmatprep.subr.bf16.mxu0 %v1258
      %1322 = vmatpush1.bf16.msra.mxu0 %v1257
      %1323 = vmatprep.subr.bf16.mxu0 %v1260
      %1324 = vmatpush1.bf16.msra.mxu0 %v1259
      %1325 = vmatprep.subr.bf16.mxu0 %v1262
      %1326 = vmatpush1.bf16.msra.mxu0 %v1261
      %1327 = vmatprep.subr.bf16.mxu0 %v1264
      %1328 = vmatpush1.bf16.msra.mxu0 %v1263
      %1329 = vmatprep.subr.bf16.mxu0 %v1266
      %1330 = vmatpush1.bf16.msra.mxu0 %v1265
      %1331 = vmatprep.subr.bf16.mxu0 %v1268
      %1332 = vmatpush1.bf16.msra.mxu0 %v1267
      %1333 = vmatprep.subr.bf16.mxu0 %v1270
      %1334 = vmatpush1.bf16.msra.mxu0 %v1269
      %1335 = vmatprep.subr.bf16.mxu0 %v1272
      %1336 = vmatpush1.bf16.msra.mxu0 %v1271
      %1337 = vmatprep.subr.bf16.mxu0 %v1274
      %1338 = vmatpush1.bf16.msra.mxu0 %v1273
      %1339 = vmatprep.subr.bf16.mxu0 %v1276
      %1340 = vmatpush1.bf16.msra.mxu0 %v1275
      %1341 = vmatprep.subr.bf16.mxu0 %v1278
      %1342 = vmatpush1.bf16.msra.mxu0 %v1277
      %1343 = vmatprep.mubr.bf16.mxu0 %v1105
      %1344 = vmatmul.mubr.bf16.gmra.mrb[0].mxu0 %v1104
      %v1345 = vpop.f32.mrb[0].mxu0
      %v1346 = vadd.f32 %v1144, %v1345
      %v1347 = vpop.f32.mrb[0].mxu0
      %v1348 = vadd.f32 %v1148, %v1347
      %v1349 = vpop.f32.mrb[0].mxu0
      %v1350 = vpop.f32.mrb[0].mxu0
      %1351 = vdwg.mxu0
      %v1352 = vmax.f32 %v1346, 0.0
      %v1353 = vmax.f32 %v1348, 0.0
      %v1356 = vcombine.low %v1352, %v1353
      %v1358 = vunpack.c.l.s4 1983009808
      %v1359 = vunpack.c.0.s8 %v1358
      %v1360 = vlaneseq
      %v1361 = vshrl.u32 %v1360, 7
      %v1362 = vsub.s32 %v1359, %v1361
      %v1363 = vrot.slane %v1356, %v1362
      %1365 = vst [vmem:[#allocation8] sm:$0xf] %v1363
    $region41: #{tpu_custom_call.1} parent=1 // pred_fallthru
      _
    // Predicated region
    $region42: #{tpu_custom_call.1} parent=1 // pred_check
      _
    $region43: #{tpu_custom_call.1} parent=1 // pred_check_branch
      %1367 = sbr.rel (0) target = $region45
    $region44: #{tpu_custom_call.1} parent=1 // pred_region
      %s1369 = ssub.s32 64, 64
      %1370 = vsyncadd [#allocation5], %s1369
      %s1372 = sshll.u32 [#allocation8], 4
      %s1373 = int_to_ptr.vmem [resolvable:$true] %s1372
      %1375 = dma.vmem_to_hbm [thread:$0]  %s1373, 64, %s6, [#allocation5]
    $region45: #{tpu_custom_call.1} parent=1 // pred_fallthru
      _
    // Predicated region
    $region46: #{tpu_custom_call.1} parent=1 // pred_check
      _
    $region47: #{tpu_custom_call.1} parent=1 // pred_check_branch
      %1377 = sbr.rel (0) target = $region49
    $region48: #{tpu_custom_call.1} parent=1 // pred_region
      %1378 = dma.done [#allocation5], 64
    $region49: #{tpu_custom_call.1} parent=1 // pred_fallthru
      _
    %1379 = vsyncpa [#allocation4], 1
    %1380 = vsyncpa [#allocation7], 1
    %1381 = vsyncpa [#allocation5], 1

</llo_original>
